<compile_context>
chip_gen: v7x
topology: tpu7x:2x2x1
jax: 0.10.0
libtpu: 0.0.40
codegen_flags: <defaults>
</compile_context>

<pallas_src>
import math

import jax
import jax.numpy as jnp
from jax import lax
from jax.experimental import pallas as pl
from jax.experimental.pallas import tpu as pltpu


# ---------------------------------------------------------------------------
# Fast path: small vocab -> table is VMEM-resident, lookup is a one-hot MXU op
# ---------------------------------------------------------------------------
def _make_small_vocab_kernel(v_pad: int, scale: float):
    def kernel(tok_ref, emb_ref, pe_ref, o_ref):
        ids = tok_ref[...]                                         # (tn, 1) int32
        cols = lax.broadcasted_iota(jnp.int32, (ids.shape[0], v_pad), 1)
        onehot = (ids == cols).astype(jnp.float32)                 # (tn, v_pad)
        emb = jnp.dot(onehot, emb_ref[...],
                      preferred_element_type=jnp.float32)          # (tn, E) MXU
        o_ref[...] = emb * jnp.float32(scale) + pe_ref[...]        # one VPU pass
    return kernel


def _embed_small_vocab(tok, pe_rows, emb_table, scale, block_tokens):
    S, B = tok.shape
    V, E = emb_table.shape
    v_pad = pl.cdiv(V, 128) * 128                  # lane-multiple contraction dim
    emb_p = jnp.pad(emb_table, ((0, v_pad - V), (0, 0)))

    n = S * B
    tn = 256 if block_tokens is None else block_tokens
    tn = max(8, (min(tn, pl.cdiv(n, 8) * 8) // 8) * 8)
    n_pad = pl.cdiv(n, tn) * tn

    tok_flat = tok.reshape(n, 1)
    pe_flat = jnp.repeat(pe_rows, B, axis=0)       # (n, E): tiny here, fine to dup
    if n_pad != n:
        tok_flat = jnp.pad(tok_flat, ((0, n_pad - n), (0, 0)))
        pe_flat = jnp.pad(pe_flat, ((0, n_pad - n), (0, 0)))

    out = pl.pallas_call(
        _make_small_vocab_kernel(v_pad, scale),
        out_shape=jax.ShapeDtypeStruct((n_pad, E), jnp.float32),
        grid=(n_pad // tn,),
        in_specs=[
            pl.BlockSpec((tn, 1), lambda i: (i, 0)),       # token ids
            pl.BlockSpec((v_pad, E), lambda i: (0, 0)),    # full table, resident
            pl.BlockSpec((tn, E), lambda i: (i, 0)),       # PE (pre-expanded)
        ],
        out_specs=pl.BlockSpec((tn, E), lambda i: (i, 0)),
        compiler_params=pltpu.CompilerParams(
            dimension_semantics=("parallel",)),
    )(tok_flat, emb_p, pe_flat)

    return out[:n].reshape(S, B, E)


# ---------------------------------------------------------------------------
# Large-vocab path: HBM row gather with pipelined PE + cross-block prefetch
# ---------------------------------------------------------------------------
def _make_gather_kernel(ts: int, batch: int, scale: float, unroll: int):
    assert ts % unroll == 0

    def kernel(tok_ids,      # SMEM scalar prefetch: (S_pad * batch,) int32
               emb_hbm,      # HBM (pl.ANY): (V, E) embedding table
               pe_ref,       # VMEM pipelined block: (ts, E) positional rows
               o_ref,        # VMEM output block: (ts, batch, E)
               emb_buf,      # VMEM scratch: (2, ts, batch, E)
               sem):         # DMA semaphores: (2,)
        i = pl.program_id(0)
        nsteps = pl.num_programs(0)
        slot = i % 2

        def issue(block, slot_):
            base = block * ts

            def body(u, carry):
                for du in range(unroll):                  # static unroll (positions)
                    s = u * unroll + du
                    flat = (base + s) * batch
                    for b in range(batch):                # static unroll (batch)
                        pltpu.make_async_copy(
                            emb_hbm.at[tok_ids[flat + b]],
                            emb_buf.at[slot_, s, b],
                            sem.at[slot_],
                        ).start()
                return carry

            lax.fori_loop(0, ts // unroll, body, None)

        # Prime the first block (grid axis is "arbitrary" => sequential).
        @pl.when(i == 0)
        def _prime():
            issue(0, 0)

        # Cross-block prefetch: issue block i+1 into the other slot before
        # waiting on block i, so the DMA engine stays busy across steps.
        @pl.when(i + 1 < nsteps)
        def _prefetch_next():
            issue(i + 1, 1 - slot)

        # Single collapsed wait: all ts*batch row copies for this block target
        # emb_buf[slot] and share sem[slot]; one descriptor over the full slot
        # view waits for exactly that total byte count.
        pltpu.make_async_copy(emb_buf.at[slot], emb_buf.at[slot],
                              sem.at[slot]).wait()

        # Scale + broadcast-add PE across the batch dim; lane-dense store.
        o_ref[...] = (emb_buf[slot] * jnp.float32(scale)
                      + pe_ref[...][:, None, :])

    return kernel


def _embed_gather(tok, pe_rows, emb_table, scale, block_positions):
    S, B = tok.shape
    V, E = emb_table.shape

    # ~256 gathered tokens per block by default (amortize per-step overhead);
    # ts is a multiple of 8 (sublanes / PE BlockSpec constraint).
    if block_positions is None:
        block_positions = max(8, ((256 // max(B, 1)) // 8) * 8)
    ts = max(8, (block_positions // 8) * 8)
    ts = min(ts, pl.cdiv(S, 8) * 8)
    S_pad = pl.cdiv(S, ts) * ts

    tok_p = tok if S_pad == S else jnp.pad(tok, ((0, S_pad - S), (0, 0)))
    pe_p = pe_rows if S_pad == S else jnp.pad(pe_rows, ((0, S_pad - S), (0, 0)))
    tok_flat = tok_p.reshape(S_pad * B)

    inner_unroll = 8 if B <= 4 else (4 if B <= 16 else 1)
    kernel = _make_gather_kernel(ts, B, scale, unroll=min(inner_unroll, ts))

    out = pl.pallas_call(
        kernel,
        out_shape=jax.ShapeDtypeStruct((S_pad, B, E), jnp.float32),
        grid_spec=pltpu.PrefetchScalarGridSpec(
            num_scalar_prefetch=1,                 # token ids -> SMEM
            grid=(S_pad // ts,),
            in_specs=[
                pl.BlockSpec(memory_space=pl.ANY),                  # table in HBM
                pl.BlockSpec((ts, E), lambda i, tok_ids: (i, 0)),   # PE pipelined
            ],
            out_specs=pl.BlockSpec((ts, B, E), lambda i, tok_ids: (i, 0, 0)),
            scratch_shapes=[
                pltpu.VMEM((2, ts, B, E), jnp.float32),   # double-buffered gather
                pltpu.SemaphoreType.DMA((2,)),
            ],
        ),
        # "arbitrary": the cross-block scratch carry requires sequential steps.
        compiler_params=pltpu.CompilerParams(
            dimension_semantics=("arbitrary",)),
    )(tok_flat, emb_table, pe_p)

    return out[:S]


# ---------------------------------------------------------------------------
# Public wrapper
# ---------------------------------------------------------------------------
def embed_posenc_forward(tokens: jax.Array,
                         emb_table: jax.Array,
                         pos_table: jax.Array,
                         *,
                         block_tokens: int | None = None,
                         block_positions: int | None = None,
                         use_gather: bool | None = None) -> jax.Array:
    """Fused `Embedding(tokens) * sqrt(E) + pos_table[:S]` (dropout = identity).

    tokens:    (S, B) integer array (seq-first, PyTorch Transformer layout)
    emb_table: (V, E) float32 embedding weights
    pos_table: (P, E) float32 sinusoidal positional encodings, P >= S
    returns    (S, B, E) float32
    """
    S, B = tokens.shape
    V, E = emb_table.shape
    scale = math.sqrt(E)

    # torch raises on OOB ids; we clamp instead so no HBM read can be OOB.
    tok = jnp.clip(tokens.astype(jnp.int32), 0, V - 1)
    emb_f32 = emb_table.astype(jnp.float32)
    pe_rows = pos_table[:S].astype(jnp.float32)

    v_pad = pl.cdiv(V, 128) * 128
    table_small = (v_pad <= 2048) and (v_pad * E * 4 <= 4 * 1024 * 1024)
    if use_gather is None:
        use_gather = not table_small

    if use_gather:
        return _embed_gather(tok, pe_rows, emb_f32, scale, block_positions)
    return _embed_small_vocab(tok, pe_rows, emb_f32, scale, block_tokens)


def make_positional_encoding(embed_size: int, max_pos: int) -> jax.Array:
    """Same table as the PyTorch PositionalEncoding buffer, shape (max_pos, E)."""
    den = jnp.exp(-jnp.arange(0, embed_size, 2, dtype=jnp.float32)
                  * (math.log(10000.0) / embed_size))
    pos = jnp.arange(max_pos, dtype=jnp.float32)[:, None]
    ang = pos * den[None, :]
    # interleave: even columns = sin, odd columns = cos
    return jnp.stack([jnp.sin(ang), jnp.cos(ang)], axis=-1).reshape(max_pos, embed_size)


if __name__ == "__main__":
    # Small shapes consistent with the Translator front-end:
    #   embed_size=128, source_vocab=50, target_vocab=60, seq 8/9, batch=2.
    EMBED = 128
    MAX_POS = 64
    SRC_VOCAB, TGT_VOCAB = 50, 60
    S_SRC, S_TGT, BATCH = 8, 9, 2

    key = jax.random.PRNGKey(0)
    k1, k2, k3, k4, k5 = jax.random.split(key, 5)

    src_table = jax.random.normal(k1, (SRC_VOCAB, EMBED), dtype=jnp.float32)
    tgt_table = jax.random.normal(k2, (TGT_VOCAB, EMBED), dtype=jnp.float32)
    pe_table = make_positional_encoding(EMBED, MAX_POS)

    source = jax.random.randint(k3, (S_SRC, BATCH), 0, SRC_VOCAB, dtype=jnp.int32)
    target = jax.random.randint(k4, (S_TGT, BATCH), 0, TGT_VOCAB, dtype=jnp.int32)

    def reference(tokens, table):
        s = tokens.shape[0]
        return table[tokens] * jnp.float32(math.sqrt(EMBED)) + pe_table[:s][:, None, :]

    # Translator.forward's first two lines; tiny tables -> fast (VMEM/MXU) path.
    src_emb = embed_posenc_forward(source, src_table, pe_table)
    tgt_emb = embed_posenc_forward(target, tgt_table, pe_table)
    src_emb, tgt_emb = jax.block_until_ready((src_emb, tgt_emb))
    assert src_emb.shape == (S_SRC, BATCH, EMBED), src_emb.shape
    assert tgt_emb.shape == (S_TGT, BATCH, EMBED), tgt_emb.shape
    assert jnp.allclose(src_emb, reference(source, src_table), atol=1e-5, rtol=1e-5)
    assert jnp.allclose(tgt_emb, reference(target, tgt_table), atol=1e-5, rtol=1e-5)

    # Large-vocab HBM-gather path, forced on the same data (single block).
    src_emb_g = jax.block_until_ready(
        embed_posenc_forward(source, src_table, pe_table, use_gather=True))
    assert jnp.allclose(src_emb_g, reference(source, src_table), atol=1e-5, rtol=1e-5)

    # Gather path with a multi-step grid (grid=(5,)): exercises padding,
    # cross-block prefetch into alternating slots, and the collapsed waits.
    S2, B2 = 40, 4
    toks2 = jax.random.randint(k5, (S2, B2), 0, SRC_VOCAB, dtype=jnp.int32)
    out2 = jax.block_until_ready(
        embed_posenc_forward(toks2, src_table, pe_table,
                             use_gather=True, block_positions=8))
    assert out2.shape == (S2, B2, EMBED), out2.shape
    assert jnp.allclose(out2, reference(toks2, src_table), atol=1e-5, rtol=1e-5)

    # Fast path with a multi-step grid as well (block_tokens=64 -> grid=(3,)).
    out3 = jax.block_until_ready(
        embed_posenc_forward(toks2, src_table, pe_table, block_tokens=64))
    assert jnp.allclose(out3, reference(toks2, src_table), atol=1e-5, rtol=1e-5)

    print("KERNEL_OK")
</pallas_src>

<mosaic_0001>
module attributes {stable_mosaic.version = 11 : i64} {
  func.func @kernel(%arg0: i32, %arg1: memref<16x1xi32, #tpu.memory_space<vmem>>, %arg2: memref<128x128xf32, #tpu.memory_space<vmem>>, %arg3: memref<16x128xf32, #tpu.memory_space<vmem>>, %arg4: memref<16x128xf32, #tpu.memory_space<vmem>>) attributes {dimension_semantics = [#tpu.dimension_semantics<parallel>], iteration_bounds = array<i64: 1>, scalar_prefetch = 0 : i64, scratch_operands = 0 : i64, tpu.core_type = #tpu.core_type<tc>, window_params = [{transform_indices = @transform_0, window_bounds = array<i64: 16, 1>}, {pipeline_mode = #tpu.pipeline_mode<synchronous>, transform_indices = @transform_1, window_bounds = array<i64: 128, 128>}, {transform_indices = @transform_2, window_bounds = array<i64: 16, 128>}, {transform_indices = @transform_3, window_bounds = array<i64: 16, 128>}]} {
    %c0 = arith.constant 0 : index
    %c0_0 = arith.constant 0 : index
    %0 = vector.load %arg1[%c0, %c0_0] : memref<16x1xi32, #tpu.memory_space<vmem>>, vector<16x1xi32>
    %1 = tpu.iota {dimensions = array<i32: 1>} : vector<16x128xi32>
    %2 = vector.broadcast %0 : vector<16x1xi32> to vector<16x128xi32>
    %3 = arith.cmpi eq, %2, %1 : vector<16x128xi32>
    %4 = arith.extui %3 : vector<16x128xi1> to vector<16x128xi32>
    %5 = arith.sitofp %4 : vector<16x128xi32> to vector<16x128xf32>
    %c0_1 = arith.constant 0 : index
    %c0_2 = arith.constant 0 : index
    %6 = vector.load %arg2[%c0_1, %c0_2] : memref<128x128xf32, #tpu.memory_space<vmem>>, vector<128x128xf32>
    %cst = arith.constant dense<0.000000e+00> : vector<16x128xf32>
    %7 = tpu.matmul %5, %6, %cst {dimension_numbers = #tpu.dot_dimension_numbers<[1], [0], [0], [1], [0, 0, 1, 1], [], []>} : vector<16x128xf32>, vector<128x128xf32>, vector<16x128xf32> -> vector<16x128xf32>
    %cst_3 = arith.constant 11.3137083 : f32
    %8 = vector.broadcast %cst_3 : f32 to vector<16x128xf32>
    %9 = arith.mulf %7, %8 : vector<16x128xf32>
    %c0_4 = arith.constant 0 : index
    %c0_5 = arith.constant 0 : index
    %10 = vector.load %arg3[%c0_4, %c0_5] : memref<16x128xf32, #tpu.memory_space<vmem>>, vector<16x128xf32>
    %11 = arith.addf %9, %10 : vector<16x128xf32>
    %c0_6 = arith.constant 0 : index
    %c0_7 = arith.constant 0 : index
    %12 = vector.load %arg4[%c0_6, %c0_7] : memref<16x128xf32, #tpu.memory_space<vmem>>, vector<16x128xf32>
    tpu.vector_store %arg4[%c0_6, %c0_7], %11 {strides = array<i32>} : memref<16x128xf32, #tpu.memory_space<vmem>>, vector<16x128xf32>,
    return
  }
  func.func @transform_0(%arg0: i32) -> (i32, i32) {
    %c0_i32 = arith.constant 0 : i32
    %c0_i32_0 = arith.constant 0 : i32
    return %arg0, %c0_i32 : i32, i32
  }
  func.func @transform_1(%arg0: i32) -> (i32, i32) {
    %c0_i32 = arith.constant 0 : i32
    %c0_i32_0 = arith.constant 0 : i32
    %c0_i32_1 = arith.constant 0 : i32
    return %c0_i32, %c0_i32_0 : i32, i32
  }
  func.func @transform_2(%arg0: i32) -> (i32, i32) {
    %c0_i32 = arith.constant 0 : i32
    %c0_i32_0 = arith.constant 0 : i32
    return %arg0, %c0_i32 : i32, i32
  }
  func.func @transform_3(%arg0: i32) -> (i32, i32) {
    %c0_i32 = arith.constant 0 : i32
    %c0_i32_0 = arith.constant 0 : i32
    return %arg0, %c0_i32 : i32, i32
  }
}

</mosaic_0001>

<llo_original>
// kernel: tpu_custom_call.1
$region0: #{tpu_custom_call.1}
  #allocation0 [shape = 'u32[]', space=smem, size = 0x4, offset = 0x4, fixed_abs, tag = 'smem constant byte address 0x4 - core index']
  #allocation1 [shape = 'u32[144,128]{1,0:T(1,128)}', space=vmem, size = 0x12000, scoped, tag = 'internal scratch']
  %s0 = inlined_call_operand.vmem [shape: s32[16,1], index: 0, kind: input, shape index: {}]
  %s1 = inlined_call_operand.hbm [shape: f32[128,128], index: 1, kind: input, shape index: {}]
  %s2 = inlined_call_operand.vmem [shape: f32[16,128], index: 2, kind: input, shape index: {}]
  %s3 = inlined_call_operand.hbm [shape: f32[16,128], index: 3, kind: output, shape index: {}]
  %s4 = sld [smem:[#allocation0]]
  $region26: #{tpu_custom_call.1} parent=0
    _
  %s6 = ssub.s32 1, %s4
  %s7 = scalar_select 0, %s6, %s4
  $region1: #{tpu_custom_call.1} parent=0
    #allocation2 [shape = 'u8[65536]{0}', space=vmem, size = 0x10000, scoped, tag = 'input window, operand 1, single buffered']
    #allocation3 [shape = 's32[1]{0}', space=sflag, size = 0x4, scoped, tag = 'scoped memory for tpu_custom_call.1']
    #allocation4 [shape = 's32[1]{0}', space=sflag, size = 0x4, scoped, tag = 'scoped memory for tpu_custom_call.1']
    #allocation5 [shape = 'u8[8192]{0}', space=vmem, size = 0x2000, scoped, tag = 'output window, operand 0, single buffered']
    %8 = vsyncpa [#allocation3], 0
    %9 = vsyncpa [#allocation4], 0
    // Predicated region
    $region2: #{tpu_custom_call.1} parent=1 // pred_check
      _
    $region3: #{tpu_custom_call.1} parent=1 // pred_check_branch
      %11 = sbr.rel (0) target = $region5
    $region4: #{tpu_custom_call.1} parent=1 // pred_region
      _
    $region5: #{tpu_custom_call.1} parent=1 // pred_fallthru
      _
    // Predicated region
    $region6: #{tpu_custom_call.1} parent=1 // pred_check
      _
    $region7: #{tpu_custom_call.1} parent=1 // pred_check_branch
      %13 = sbr.rel (0) target = $region9
    $region8: #{tpu_custom_call.1} parent=1 // pred_region
      %s15 = ssub.s32 2048, 2048
      %16 = vsyncadd [#allocation3], %s15
      %s17 = sshll.u32 [#allocation2], 4
      %s18 = int_to_ptr.vmem [resolvable:$true] %s17
      %23 = dma.hbm_to_vmem [thread:$0]  %s1, 2048, %s18, [#allocation3], 128, 128, 8
    $region9: #{tpu_custom_call.1} parent=1 // pred_fallthru
      _
    // Predicated region
    $region10: #{tpu_custom_call.1} parent=1 // pred_check
      _
    $region11: #{tpu_custom_call.1} parent=1 // pred_check_branch
      %25 = sbr.rel (0) target = $region13
    $region12: #{tpu_custom_call.1} parent=1 // pred_region
      _
    $region13: #{tpu_custom_call.1} parent=1 // pred_fallthru
      _
    // Predicated region
    $region14: #{tpu_custom_call.1} parent=1 // pred_check
      _
    $region15: #{tpu_custom_call.1} parent=1 // pred_check_branch
      %27 = sbr.rel (0) target = $region17
    $region16: #{tpu_custom_call.1} parent=1 // pred_region
      %28 = dma.done [#allocation3], 2048
    $region17: #{tpu_custom_call.1} parent=1 // pred_fallthru
      _
    %v29 = vld [vmem:[%s0] sm:$0xff]
    %v30 = vld [vmem:[%s0 + $0x8] sm:$0xff]
    %v31 = vlaneseq
    %v32 = vand.u32 %v31, 127
    %33 = vset.pattern.permute.xlu0 0
    %34 = vperm.xlu0 %33, %v29
    %v35 = vpop.permute.xlu0 %34
    %36 = vset.pattern.permute.xlu0 0
    %37 = vperm.xlu0 %36, %v30
    %v38 = vpop.permute.xlu0 %37
    %vm39 = vcmp.eq.s32.totalorder %v35, %v32
    %vm40 = vcmp.eq.s32.totalorder %v38, %v32
    %v41 = vsel %vm39, 1, 0
    %v42 = vsel %vm40, 1, 0
    %v43 = vcvt.s32.f32 %v41
    %v44 = vcvt.s32.f32 %v42
    %v45 = vld [vmem:[#allocation2] sm:$0xff]
    %v46 = vld [vmem:[#allocation2 + $0x8] sm:$0xff]
    %v47 = vld [vmem:[#allocation2 + $0x10] sm:$0xff]
    %v48 = vld [vmem:[#allocation2 + $0x18] sm:$0xff]
    %v49 = vld [vmem:[#allocation2 + $0x20] sm:$0xff]
    %v50 = vld [vmem:[#allocation2 + $0x28] sm:$0xff]
    %v51 = vld [vmem:[#allocation2 + $0x30] sm:$0xff]
    %v52 = vld [vmem:[#allocation2 + $0x38] sm:$0xff]
    %v53 = vld [vmem:[#allocation2 + $0x40] sm:$0xff]
    %v54 = vld [vmem:[#allocation2 + $0x48] sm:$0xff]
    %v55 = vld [vmem:[#allocation2 + $0x50] sm:$0xff]
    %v56 = vld [vmem:[#allocation2 + $0x58] sm:$0xff]
    %v57 = vld [vmem:[#allocation2 + $0x60] sm:$0xff]
    %v58 = vld [vmem:[#allocation2 + $0x68] sm:$0xff]
    %v59 = vld [vmem:[#allocation2 + $0x70] sm:$0xff]
    %v60 = vld [vmem:[#allocation2 + $0x78] sm:$0xff]
    %61 = vmatprep.subr.mxu0 0.0
    %62 = vmatpush1.msra.mxu0 %v45
    %63 = vmatprep.subr.mxu0 0.0
    %64 = vmatpush1.msra.mxu0 %v46
    %65 = vmatprep.subr.mxu0 0.0
    %66 = vmatpush1.msra.mxu0 %v47
    %67 = vmatprep.subr.mxu0 0.0
    %68 = vmatpush1.msra.mxu0 %v48
    %69 = vmatprep.subr.mxu0 0.0
    %70 = vmatpush1.msra.mxu0 %v49
    %71 = vmatprep.subr.mxu0 0.0
    %72 = vmatpush1.msra.mxu0 %v50
    %73 = vmatprep.subr.mxu0 0.0
    %74 = vmatpush1.msra.mxu0 %v51
    %75 = vmatprep.subr.mxu0 0.0
    %76 = vmatpush1.msra.mxu0 %v52
    %77 = vmatprep.subr.mxu0 0.0
    %78 = vmatpush1.msra.mxu0 %v53
    %79 = vmatprep.subr.mxu0 0.0
    %80 = vmatpush1.msra.mxu0 %v54
    %81 = vmatprep.subr.mxu0 0.0
    %82 = vmatpush1.msra.mxu0 %v55
    %83 = vmatprep.subr.mxu0 0.0
    %84 = vmatpush1.msra.mxu0 %v56
    %85 = vmatprep.subr.mxu0 0.0
    %86 = vmatpush1.msra.mxu0 %v57
    %87 = vmatprep.subr.mxu0 0.0
    %88 = vmatpush1.msra.mxu0 %v58
    %89 = vmatprep.subr.mxu0 0.0
    %90 = vmatpush1.msra.mxu0 %v59
    %91 = vmatprep.subr.mxu0 0.0
    %92 = vmatpush1.msra.mxu0 %v60
    %93 = vmatprep.subr.mxu0 0.0
    %94 = vmatpush1.msra.mxu0 0.0
    %95 = vmatprep.subr.mxu0 0.0
    %96 = vmatpush1.msra.mxu0 0.0
    %97 = vmatprep.subr.mxu0 0.0
    %98 = vmatpush1.msra.mxu0 0.0
    %99 = vmatprep.subr.mxu0 0.0
    %100 = vmatpush1.msra.mxu0 0.0
    %101 = vmatprep.subr.mxu0 0.0
    %102 = vmatpush1.msra.mxu0 0.0
    %103 = vmatprep.subr.mxu0 0.0
    %104 = vmatpush1.msra.mxu0 0.0
    %105 = vmatprep.subr.mxu0 0.0
    %106 = vmatpush1.msra.mxu0 0.0
    %107 = vmatprep.subr.mxu0 0.0
    %108 = vmatpush1.msra.mxu0 0.0
    %109 = vmatprep.subr.mxu0 0.0
    %110 = vmatpush1.msra.mxu0 0.0
    %111 = vmatprep.subr.mxu0 0.0
    %112 = vmatpush1.msra.mxu0 0.0
    %113 = vmatprep.subr.mxu0 0.0
    %114 = vmatpush1.msra.mxu0 0.0
    %115 = vmatprep.subr.mxu0 0.0
    %116 = vmatpush1.msra.mxu0 0.0
    %117 = vmatprep.subr.mxu0 0.0
    %118 = vmatpush1.msra.mxu0 0.0
    %119 = vmatprep.subr.mxu0 0.0
    %120 = vmatpush1.msra.mxu0 0.0
    %121 = vmatprep.subr.mxu0 0.0
    %122 = vmatpush1.msra.mxu0 0.0
    %123 = vmatprep.subr.mxu0 0.0
    %124 = vmatpush1.msra.mxu0 0.0
    %125 = vmatprep.mubr.f32.mxu0 0.0
    %126 = vmatmul.mubr.f32.gmra.mrb[0].mxu0 %v43
    %v127 = vpop.f32.mrb[0].mxu0
    %v128 = vadd.f32 0.0, %v127
    %v129 = vpop.f32.mrb[0].mxu0
    %130 = vmatprep.mubr.f32.mxu0 0.0
    %131 = vmatmul.mubr.f32.gmra.mrb[0].mxu0 %v44
    %v132 = vpop.f32.mrb[0].mxu0
    %v133 = vadd.f32 0.0, %v132
    %v134 = vpop.f32.mrb[0].mxu0
    %135 = vdwg.mxu0
    %v136 = vmul.f32 %v128, 11.313708
    %v137 = vmul.f32 %v133, 11.313708
    %v138 = vld [vmem:[%s2] sm:$0xff]
    %v139 = vld [vmem:[%s2 + $0x8] sm:$0xff]
    %v140 = vadd.f32 %v136, %v138
    %v141 = vadd.f32 %v137, %v139
    %142 = vst [vmem:[#allocation5] sm:$0xff] %v140
    %143 = vst [vmem:[#allocation5 + $0x8] sm:$0xff] %v141
    // Predicated region
    $region18: #{tpu_custom_call.1} parent=1 // pred_check
      _
    $region19: #{tpu_custom_call.1} parent=1 // pred_check_branch
      %145 = sbr.rel (0) target = $region21
    $region20: #{tpu_custom_call.1} parent=1 // pred_region
      %s147 = ssub.s32 256, 256
      %148 = vsyncadd [#allocation4], %s147
      %s149 = sshll.u32 [#allocation5], 4
      %s150 = int_to_ptr.vmem [resolvable:$true] %s149
      %155 = dma.vmem_to_hbm [thread:$0]  %s150, 256, %s3, [#allocation4], 128, 128, 8
    $region21: #{tpu_custom_call.1} parent=1 // pred_fallthru
      _
    // Predicated region
    $region22: #{tpu_custom_call.1} parent=1 // pred_check
      _
    $region23: #{tpu_custom_call.1} parent=1 // pred_check_branch
      %157 = sbr.rel (0) target = $region25
    $region24: #{tpu_custom_call.1} parent=1 // pred_region
      %158 = dma.done [#allocation4], 256
    $region25: #{tpu_custom_call.1} parent=1 // pred_fallthru
      _
    %159 = vsyncpa [#allocation3], 1
    %160 = vsyncpa [#allocation4], 1

</llo_original>
